<compile_context>
chip_gen: v5e
topology: v5e:2x2
jax: 0.10.0
libtpu: 0.0.40
codegen_flags: <defaults>
</compile_context>

<pallas_src>
import functools

import jax
import jax.numpy as jnp
from jax.experimental import pallas as pl
from jax.experimental.pallas import tpu as pltpu


# ----------------------------------------------------------------------------
# helpers
# ----------------------------------------------------------------------------
def _round_up(x, m):
    return (x + m - 1) // m * m


def _pick_tile(dim, candidates):
    """Largest candidate that evenly divides `dim`, else the full dim."""
    for c in candidates:
        if dim % c == 0:
            return c
    return dim


# ----------------------------------------------------------------------------
# Pallas kernel 1: tiled matmul + bias (+ ReLU6) (+ fused residual add)
#   x: (M, K) bf16,  w: (K, N) bf16,  bias: (1, N) f32,  out: (M, N) bf16
#   grid = (M/tm, N/tn, K/tk), f32 accumulator scratch, epilogue on last K step
# ----------------------------------------------------------------------------
def _mm_kernel(x_ref, w_ref, b_ref, o_ref, acc_ref, *, relu6):
    @pl.when(pl.program_id(2) == 0)
    def _():
        acc_ref[...] = jnp.zeros_like(acc_ref)

    acc_ref[...] += jnp.dot(x_ref[...], w_ref[...],
                            preferred_element_type=jnp.float32)

    @pl.when(pl.program_id(2) == pl.num_programs(2) - 1)
    def _():
        r = acc_ref[...] + b_ref[...].astype(jnp.float32)
        if relu6:
            r = jnp.clip(r, 0.0, 6.0)
        o_ref[...] = r.astype(o_ref.dtype)


def _mm_res_kernel(x_ref, w_ref, b_ref, r_ref, o_ref, acc_ref, *, relu6):
    @pl.when(pl.program_id(2) == 0)
    def _():
        acc_ref[...] = jnp.zeros_like(acc_ref)

    acc_ref[...] += jnp.dot(x_ref[...], w_ref[...],
                            preferred_element_type=jnp.float32)

    @pl.when(pl.program_id(2) == pl.num_programs(2) - 1)
    def _():
        r = acc_ref[...] + b_ref[...].astype(jnp.float32)
        if relu6:
            r = jnp.clip(r, 0.0, 6.0)
        r = r + r_ref[...].astype(jnp.float32)          # fused residual add
        o_ref[...] = r.astype(o_ref.dtype)


def matmul_bias(x, w, b, *, relu6=False, residual=None):
    """x: (M, K) bf16, w: (K, N) bf16, b: (1, N) f32 -> (M, N) bf16."""
    M, K = x.shape
    K2, N = w.shape
    assert K == K2 and b.shape == (1, N)

    # Tile sizes: 256/512-wide N & K tiles feed the 256x256 MXU on v6e/v7x;
    # everything stays well under the 16 MiB v5e scoped-VMEM default even with
    # double buffering (worst case ~5 MiB at 512-wide tiles).
    tm = _pick_tile(M, (512, 256, 128, 64, 32, 16, 8))
    tn = _pick_tile(N, (512, 256, 128))
    tk = _pick_tile(K, (512, 384, 256, 128))
    grid = (M // tm, N // tn, K // tk)

    in_specs = [
        pl.BlockSpec((tm, tk), lambda i, j, k: (i, k)),
        pl.BlockSpec((tk, tn), lambda i, j, k: (k, j)),
        pl.BlockSpec((1, tn), lambda i, j, k: (0, j)),
    ]
    if residual is None:
        kern = functools.partial(_mm_kernel, relu6=relu6)
        args = (x, w, b)
    else:
        assert residual.shape == (M, N)
        kern = functools.partial(_mm_res_kernel, relu6=relu6)
        in_specs = in_specs + [pl.BlockSpec((tm, tn), lambda i, j, k: (i, j))]
        args = (x, w, b, residual)

    return pl.pallas_call(
        kern,
        out_shape=jax.ShapeDtypeStruct((M, N), jnp.bfloat16),
        grid=grid,
        in_specs=in_specs,
        out_specs=pl.BlockSpec((tm, tn), lambda i, j, k: (i, j)),
        scratch_shapes=[pltpu.VMEM((tm, tn), jnp.float32)],
        compiler_params=pltpu.CompilerParams(
            dimension_semantics=("parallel", "parallel", "arbitrary")),
    )(*args)


# ----------------------------------------------------------------------------
# Pallas kernel 2: depthwise 3x3 conv + bias + ReLU6 (VPU), NHWC, C padded.
# No 9x tap-stack in HBM: taps are extracted in-kernel with static slices.
# ----------------------------------------------------------------------------
def _dw_s1_kernel(x_ref, w_ref, b_ref, o_ref):
    # x block: (1, H+2, W+2, Ct)   out block: (1, H, W, Ct)
    Ho, Wo, Ct = o_ref.shape[1], o_ref.shape[2], o_ref.shape[3]
    xv = x_ref[0].astype(jnp.float32)
    wv = w_ref[...].astype(jnp.float32)       # (9, Ct)
    bv = b_ref[...].astype(jnp.float32)       # (1, Ct)
    acc = jnp.zeros((Ho, Wo, Ct), jnp.float32)
    for di in range(3):                       # static unroll over the 9 taps
        for dj in range(3):
            acc = acc + xv[di:di + Ho, dj:dj + Wo, :] * wv[3 * di + dj]
    o_ref[0] = jnp.clip(acc + bv, 0.0, 6.0).astype(o_ref.dtype)


def _dw_s2_kernel(x_ref, w_ref, b_ref, o_ref):
    # x block: (1, 4, Hh, Wh, Ct) -- 4 space-to-depth phases of the padded input
    # so that every stride-2 tap is a *contiguous* static slice.
    Ho, Wo, Ct = o_ref.shape[1], o_ref.shape[2], o_ref.shape[3]
    xv = x_ref[0].astype(jnp.float32)
    wv = w_ref[...].astype(jnp.float32)
    bv = b_ref[...].astype(jnp.float32)
    acc = jnp.zeros((Ho, Wo, Ct), jnp.float32)
    for di in range(3):
        for dj in range(3):
            ph = 2 * (di % 2) + (dj % 2)
            oi, oj = di // 2, dj // 2
            acc = acc + xv[ph, oi:oi + Ho, oj:oj + Wo, :] * wv[3 * di + dj]
    o_ref[0] = jnp.clip(acc + bv, 0.0, 6.0).astype(o_ref.dtype)


def depthwise3x3(x, w9, b, *, stride):
    """x: (N,H,W,Cp) bf16 (channel-padded), w9: (9,Cp) f32, b: (1,Cp) f32."""
    N, H, W, Cp = x.shape
    Ho = (H - 1) // stride + 1
    Wo = (W - 1) // stride + 1
    ctile = _pick_tile(Cp, (512, 384, 256, 128))
    grid = (N, Cp // ctile)
    cparams = pltpu.CompilerParams(dimension_semantics=("parallel", "parallel"))
    w_spec = pl.BlockSpec((9, ctile), lambda n, c: (0, c))
    b_spec = pl.BlockSpec((1, ctile), lambda n, c: (0, c))
    out_spec = pl.BlockSpec((1, Ho, Wo, ctile), lambda n, c: (n, 0, 0, c))
    out_shape = jax.ShapeDtypeStruct((N, Ho, Wo, Cp), x.dtype)

    if stride == 1:
        xp = jnp.pad(x, ((0, 0), (1, 1), (1, 1), (0, 0)))
        return pl.pallas_call(
            _dw_s1_kernel,
            out_shape=out_shape,
            grid=grid,
            in_specs=[pl.BlockSpec((1, H + 2, W + 2, ctile),
                                   lambda n, c: (n, 0, 0, c)),
                      w_spec, b_spec],
            out_specs=out_spec,
            compiler_params=cparams,
        )(xp, w9, b)

    # stride == 2: spatial pad (+extra bottom/right row if needed so the padded
    # extent is even), then split into the 4 even/odd phases.
    xp = jnp.pad(x, ((0, 0), (1, 1 + H % 2), (1, 1 + W % 2), (0, 0)))
    Hh, Wh = xp.shape[1] // 2, xp.shape[2] // 2
    phases = [xp[:, p::2, q::2, :] for p in (0, 1) for q in (0, 1)]
    xph = jnp.stack(phases, axis=1)           # (N, 4, Hh, Wh, Cp)
    return pl.pallas_call(
        _dw_s2_kernel,
        out_shape=out_shape,
        grid=grid,
        in_specs=[pl.BlockSpec((1, 4, Hh, Wh, ctile),
                               lambda n, c: (n, 0, 0, 0, c)),
                  w_spec, b_spec],
        out_specs=out_spec,
        compiler_params=cparams,
    )(xph, w9, b)


# ----------------------------------------------------------------------------
# conv wrappers built on the matmul kernel
# ----------------------------------------------------------------------------
def conv1x1(x, w, b, *, relu6, residual=None):
    """Pointwise conv. x: (N,H,W,Cp) bf16, w: (Cp, Cpo) bf16 (pre-padded)."""
    N, H, W, Cp = x.shape
    M = N * H * W
    res = None if residual is None else residual.reshape(M, w.shape[1])
    out = matmul_bias(x.reshape(M, Cp), w, b, relu6=relu6, residual=res)
    return out.reshape(N, H, W, w.shape[1])


def conv3x3_stem(x, w, b, *, stride):
    """Dense 3x3 conv (pad=1) via im2col + tiled matmul.  Only used for the
    3-channel stem, so the 9x im2col replication is negligible (K=27)."""
    N, H, W, Cin = x.shape
    Ho = (H - 1) // stride + 1
    Wo = (W - 1) // stride + 1
    xp = jnp.pad(x, ((0, 0), (1, 1), (1, 1), (0, 0)))
    taps = [xp[:, di:di + stride * (Ho - 1) + 1:stride,
               dj:dj + stride * (Wo - 1) + 1:stride, :]
            for di in range(3) for dj in range(3)]
    patches = jnp.concatenate(taps, axis=-1).reshape(N * Ho * Wo, 9 * Cin)
    out = matmul_bias(patches.astype(jnp.bfloat16), w, b, relu6=True)
    return out.reshape(N, Ho, Wo, -1)


# ----------------------------------------------------------------------------
# MobileNetV2 parameters (BN folded, channel dims padded once, bf16 weights)
# ----------------------------------------------------------------------------
_INVERTED_RESIDUAL_CFG = [
    # (expand_ratio t, out_channels c, repeats n, first stride s)
    (1, 16, 1, 1),
    (6, 24, 2, 2),
    (6, 32, 3, 2),
    (6, 64, 4, 2),
    (6, 96, 3, 1),
    (6, 160, 3, 2),
    (6, 320, 1, 1),
]


def _conv_bn_params(key, w_shape, cout, scale):
    """Conv weight with eval-mode BN folded in (out-channel axis last).
    NOTE: synthetic fold (w*gamma, beta); real BN stats would also need
    running_mean / running_var."""
    kw, kg, kb = jax.random.split(key, 3)
    w = jax.random.normal(kw, w_shape, jnp.float32) * scale
    gamma = 1.0 + 0.1 * jax.random.normal(kg, (cout,), jnp.float32)
    beta = 0.05 * jax.random.normal(kb, (cout,), jnp.float32)
    return w * gamma, beta


def _pad_mat(w, *, pad_k=True):
    K, Nc = w.shape
    Kp = _round_up(K, 128) if pad_k else K
    Np = _round_up(Nc, 128)
    out = jnp.zeros((Kp, Np), jnp.float32).at[:K, :Nc].set(w)
    return out.astype(jnp.bfloat16)


def _pad_bias(b):
    Nc = b.shape[0]
    Np = _round_up(Nc, 128)
    return jnp.zeros((1, Np), jnp.float32).at[0, :Nc].set(b)


def _pad_dw(w):
    C = w.shape[-1]
    Cp = _round_up(C, 128)
    return jnp.zeros((9, Cp), jnp.float32).at[:, :C].set(w.reshape(9, C))


def init_params(key, num_classes=2):
    keys = iter(jax.random.split(key, 64))
    params = {}

    w, b = _conv_bn_params(next(keys), (3, 3, 3, 32), 32, (1.0 / 27) ** 0.5)
    params['stem'] = {'w': _pad_mat(w.reshape(27, 32), pad_k=False),
                      'b': _pad_bias(b)}

    blocks = []
    cin = 32
    for t, c, n, s in _INVERTED_RESIDUAL_CFG:
        for i in range(n):
            stride = s if i == 0 else 1
            hidden = cin * t
            blk = {'stride': stride, 'use_res': (stride == 1 and cin == c)}
            if t != 1:
                w, b = _conv_bn_params(next(keys), (cin, hidden), hidden,
                                       (1.0 / cin) ** 0.5)
                blk['expand'] = {'w': _pad_mat(w), 'b': _pad_bias(b)}
            w, b = _conv_bn_params(next(keys), (3, 3, hidden), hidden,
                                   (1.0 / 9) ** 0.5)
            blk['dw'] = {'w': _pad_dw(w), 'b': _pad_bias(b)}
            w, b = _conv_bn_params(next(keys), (hidden, c), c,
                                   (1.0 / hidden) ** 0.5)
            blk['project'] = {'w': _pad_mat(w), 'b': _pad_bias(b)}
            blocks.append(blk)
            cin = c
    params['blocks'] = blocks

    w, b = _conv_bn_params(next(keys), (cin, 1280), 1280, (1.0 / cin) ** 0.5)
    params['head'] = {'w': _pad_mat(w), 'b': _pad_bias(b)}

    kc = next(keys)
    params['classifier'] = {
        'w': jax.random.normal(kc, (1280, num_classes), jnp.float32)
             * (1.0 / 1280) ** 0.5,
        'b': jnp.zeros((num_classes,), jnp.float32),
    }
    return params


# ----------------------------------------------------------------------------
# forward pass (FaceMask.forward == MobileNetV2 with 2-class classifier)
# ----------------------------------------------------------------------------
def face_mask_forward(params, x_nchw):
    # external input is NCHW (PyTorch); convert to NHWC so channels map to lanes
    x = jnp.transpose(x_nchw.astype(jnp.float32), (0, 2, 3, 1))

    # stem: ConvBNReLU(3 -> 32, k=3, s=2)
    x = conv3x3_stem(x, params['stem']['w'], params['stem']['b'], stride=2)

    # inverted residual blocks (residual add fused into project conv epilogue)
    for blk in params['blocks']:
        y = x
        if 'expand' in blk:
            y = conv1x1(y, blk['expand']['w'], blk['expand']['b'], relu6=True)
        y = depthwise3x3(y, blk['dw']['w'], blk['dw']['b'], stride=blk['stride'])
        y = conv1x1(y, blk['project']['w'], blk['project']['b'], relu6=False,
                    residual=x if blk['use_res'] else None)
        x = y

    # head: ConvBNReLU(320 -> 1280, k=1)
    x = conv1x1(x, params['head']['w'], params['head']['b'], relu6=True)

    # adaptive_avg_pool2d((1,1)) + flatten (trivial reduction, plain JAX)
    x = jnp.mean(x.astype(jnp.float32), axis=(1, 2))          # (N, 1280)

    # classifier: Dropout(0.2) is identity in eval; Linear(1280 -> 2) is a
    # handful of vregs, so plain JAX (no padding / pallas launch overhead).
    logits = x @ params['classifier']['w'] + params['classifier']['b']
    return logits


# ----------------------------------------------------------------------------
if __name__ == "__main__":
    key = jax.random.PRNGKey(0)
    pkey, xkey = jax.random.split(key)

    params = init_params(pkey, num_classes=2)

    # small RGB image batch, NCHW like the PyTorch module expects
    x = jax.random.normal(xkey, (2, 3, 32, 32), jnp.float32)

    out = face_mask_forward(params, x)
    out = jax.block_until_ready(out)

    assert out.shape == (2, 2), out.shape
    assert bool(jnp.all(jnp.isfinite(out)))
    print("KERNEL_OK")
</pallas_src>

<mosaic_0001>
module attributes {stable_mosaic.version = 11 : i64} {
  func.func @_mm_kernel(%arg0: i32, %arg1: i32, %arg2: i32, %arg3: memref<512x27xbf16, #tpu.memory_space<vmem>>, %arg4: memref<27x128xbf16, #tpu.memory_space<vmem>>, %arg5: memref<1x128xf32, #tpu.memory_space<vmem>>, %arg6: memref<512x128xbf16, #tpu.memory_space<vmem>>, %arg7: memref<512x128xf32, #tpu.memory_space<vmem>>) attributes {dimension_semantics = [#tpu.dimension_semantics<parallel>, #tpu.dimension_semantics<parallel>, #tpu.dimension_semantics<arbitrary>], iteration_bounds = array<i64: 1, 1, 1>, scalar_prefetch = 0 : i64, scratch_operands = 1 : i64, tpu.core_type = #tpu.core_type<tc>, window_params = [{transform_indices = @transform_0, window_bounds = array<i64: 512, 27>}, {transform_indices = @transform_1, window_bounds = array<i64: 27, 128>}, {transform_indices = @transform_2, window_bounds = array<i64: 1, 128>}, {transform_indices = @transform_3, window_bounds = array<i64: 512, 128>}]} {
    %c0_i32 = arith.constant 0 : i32
    %0 = arith.cmpi eq, %arg2, %c0_i32 : i32
    %1 = arith.extui %0 : i1 to i32
    %c0_i32_0 = arith.constant 0 : i32
    %2 = arith.cmpi ne, %1, %c0_i32_0 : i32
    scf.if %2 {
      %cst_10 = arith.constant 0.000000e+00 : f32
      %12 = vector.broadcast %cst_10 : f32 to vector<512x128xf32>
      %c0_11 = arith.constant 0 : index
      %c0_12 = arith.constant 0 : index
      %13 = vector.load %arg7[%c0_11, %c0_12] : memref<512x128xf32, #tpu.memory_space<vmem>>, vector<512x128xf32>
      tpu.vector_store %arg7[%c0_11, %c0_12], %12 {strides = array<i32>} : memref<512x128xf32, #tpu.memory_space<vmem>>, vector<512x128xf32>,
    } else {
    }
    %c0 = arith.constant 0 : index
    %c0_1 = arith.constant 0 : index
    %3 = vector.load %arg7[%c0, %c0_1] : memref<512x128xf32, #tpu.memory_space<vmem>>, vector<512x128xf32>
    %c0_2 = arith.constant 0 : index
    %c0_3 = arith.constant 0 : index
    %4 = vector.load %arg3[%c0_2, %c0_3] : memref<512x27xbf16, #tpu.memory_space<vmem>>, vector<512x27xbf16>
    %c0_4 = arith.constant 0 : index
    %c0_5 = arith.constant 0 : index
    %5 = vector.load %arg4[%c0_4, %c0_5] : memref<27x128xbf16, #tpu.memory_space<vmem>>, vector<27x128xbf16>
    %cst = arith.constant dense<0.000000e+00> : vector<512x128xf32>
    %6 = tpu.matmul %4, %5, %cst {dimension_numbers = #tpu.dot_dimension_numbers<[1], [0], [0], [1], [0, 0, 1, 1], [], []>} : vector<512x27xbf16>, vector<27x128xbf16>, vector<512x128xf32> -> vector<512x128xf32>
    %7 = arith.addf %3, %6 : vector<512x128xf32>
    %c0_6 = arith.constant 0 : index
    %c0_7 = arith.constant 0 : index
    %8 = vector.load %arg7[%c0_6, %c0_7] : memref<512x128xf32, #tpu.memory_space<vmem>>, vector<512x128xf32>
    tpu.vector_store %arg7[%c0_6, %c0_7], %7 {strides = array<i32>} : memref<512x128xf32, #tpu.memory_space<vmem>>, vector<512x128xf32>,
    %c0_i32_8 = arith.constant 0 : i32
    %9 = arith.cmpi eq, %arg2, %c0_i32_8 : i32
    %10 = arith.extui %9 : i1 to i32
    %c0_i32_9 = arith.constant 0 : i32
    %11 = arith.cmpi ne, %10, %c0_i32_9 : i32
    scf.if %11 {
      %c0_10 = arith.constant 0 : index
      %c0_11 = arith.constant 0 : index
      %12 = vector.load %arg7[%c0_10, %c0_11] : memref<512x128xf32, #tpu.memory_space<vmem>>, vector<512x128xf32>
      %c0_12 = arith.constant 0 : index
      %c0_13 = arith.constant 0 : index
      %13 = vector.load %arg5[%c0_12, %c0_13] : memref<1x128xf32, #tpu.memory_space<vmem>>, vector<1x128xf32>
      %14 = vector.broadcast %13 : vector<1x128xf32> to vector<512x128xf32>
      %15 = arith.addf %12, %14 : vector<512x128xf32>
      %cst_14 = arith.constant 0.000000e+00 : f32
      %cst_15 = arith.constant 6.000000e+00 : f32
      %16 = vector.broadcast %cst_14 : f32 to vector<512x128xf32>
      %17 = arith.maximumf %16, %15 : vector<512x128xf32>
      %18 = vector.broadcast %cst_15 : f32 to vector<512x128xf32>
      %19 = arith.minimumf %18, %17 : vector<512x128xf32>
      %20 = arith.truncf %19 : vector<512x128xf32> to vector<512x128xbf16>
      %c0_16 = arith.constant 0 : index
      %c0_17 = arith.constant 0 : index
      %21 = vector.load %arg6[%c0_16, %c0_17] : memref<512x128xbf16, #tpu.memory_space<vmem>>, vector<512x128xbf16>
      tpu.vector_store %arg6[%c0_16, %c0_17], %20 {strides = array<i32>} : memref<512x128xbf16, #tpu.memory_space<vmem>>, vector<512x128xbf16>,
    } else {
    }
    return
  }
  func.func @transform_0(%arg0: i32, %arg1: i32, %arg2: i32) -> (i32, i32) {
    %c0_i32 = arith.constant 0 : i32
    return %arg0, %arg2 : i32, i32
  }
  func.func @transform_1(%arg0: i32, %arg1: i32, %arg2: i32) -> (i32, i32) {
    %c0_i32 = arith.constant 0 : i32
    return %arg2, %arg1 : i32, i32
  }
  func.func @transform_2(%arg0: i32, %arg1: i32, %arg2: i32) -> (i32, i32) {
    %c0_i32 = arith.constant 0 : i32
    %c0_i32_0 = arith.constant 0 : i32
    return %c0_i32, %arg1 : i32, i32
  }
  func.func @transform_3(%arg0: i32, %arg1: i32, %arg2: i32) -> (i32, i32) {
    %c0_i32 = arith.constant 0 : i32
    return %arg0, %arg1 : i32, i32
  }
}

</mosaic_0001>

<llo_original>
// kernel: tpu_custom_call.1
$region0: #{tpu_custom_call.1}
  #allocation0 [shape = 'u32[]', space=smem, size = 0x4, offset = 0x4, fixed_abs, tag = 'smem constant byte address 0x4 - core index']
  #allocation1 [shape = 'u32[72,128]{1,0:T(1,128)}', space=vmem, size = 0x9000, scoped, tag = 'internal scratch']
  #allocation2 [shape = 'f32[512,128]{1,0:T(8,128)}', space=vmem, size = 0x40000, scoped, tag = 'scratch operand']
  %s0 = inlined_call_operand.vmem [shape: bf16[512,27], index: 0, kind: input, shape index: {}]
  %s1 = inlined_call_operand.vmem [shape: bf16[27,128], index: 1, kind: input, shape index: {}]
  %s2 = inlined_call_operand.vmem [shape: f32[1,128], index: 2, kind: input, shape index: {}]
  %s3 = inlined_call_operand.hbm [shape: bf16[512,128], index: 3, kind: output, shape index: {}]
  %s4 = sld [smem:[#allocation0]]
  $region30: #{tpu_custom_call.1} parent=0
    _
  %s6 = ssub.s32 1, %s4
  %s7 = scalar_select 0, %s6, %s4
  $region1: #{tpu_custom_call.1} parent=0
    #allocation3 [shape = 'u8[131072]{0}', space=vmem, size = 0x20000, scoped, tag = 'output window, operand 0, single buffered']
    #allocation4 [shape = 's32[1]{0}', space=sflag, size = 0x4, scoped, tag = 'scoped memory for tpu_custom_call.1']
    %8 = vsyncpa [#allocation4], 0
    // Predicated region
    $region2: #{tpu_custom_call.1} parent=1 // pred_check
      _
    $region3: #{tpu_custom_call.1} parent=1 // pred_check_branch
      %10 = sbr.rel (0) target = $region5
    $region4: #{tpu_custom_call.1} parent=1 // pred_region
      _
    $region5: #{tpu_custom_call.1} parent=1 // pred_fallthru
      _
    // Predicated region
    $region6: #{tpu_custom_call.1} parent=1 // pred_check
      _
    $region7: #{tpu_custom_call.1} parent=1 // pred_check_branch
      %12 = sbr.rel (0) target = $region9
    $region8: #{tpu_custom_call.1} parent=1 // pred_region
      _
    $region9: #{tpu_custom_call.1} parent=1 // pred_fallthru
      _
    // Predicated region
    $region10: #{tpu_custom_call.1} parent=1 // pred_check
      _
    $region11: #{tpu_custom_call.1} parent=1 // pred_check_branch
      %14 = sbr.rel (0) target = $region13
    $region12: #{tpu_custom_call.1} parent=1 // pred_region
      _
    $region13: #{tpu_custom_call.1} parent=1 // pred_fallthru
      _
    %p16 = scmp.eq.s32.totalorder 0, 0
    // Predicated region
    $region14: #{tpu_custom_call.1} parent=1 // pred_check
      %p17 = pneg %p16
    $region15: #{tpu_custom_call.1} parent=1 // pred_check_branch
      %19 = sbr.rel (%p17) target = $region17
    $region16: #{tpu_custom_call.1} parent=1 // pred_region
      %20 = vst [vmem:[#allocation2] sm:$0xff] 0.0
      %21 = vst [vmem:[#allocation2 + $0x8] sm:$0xff] 0.0
      %22 = vst [vmem:[#allocation2 + $0x10] sm:$0xff] 0.0
      %23 = vst [vmem:[#allocation2 + $0x18] sm:$0xff] 0.0
      %24 = vst [vmem:[#allocation2 + $0x20] sm:$0xff] 0.0
      %25 = vst [vmem:[#allocation2 + $0x28] sm:$0xff] 0.0
      %26 = vst [vmem:[#allocation2 + $0x30] sm:$0xff] 0.0
      %27 = vst [vmem:[#allocation2 + $0x38] sm:$0xff] 0.0
      %28 = vst [vmem:[#allocation2 + $0x40] sm:$0xff] 0.0
      %29 = vst [vmem:[#allocation2 + $0x48] sm:$0xff] 0.0
      %30 = vst [vmem:[#allocation2 + $0x50] sm:$0xff] 0.0
      %31 = vst [vmem:[#allocation2 + $0x58] sm:$0xff] 0.0
      %32 = vst [vmem:[#allocation2 + $0x60] sm:$0xff] 0.0
      %33 = vst [vmem:[#allocation2 + $0x68] sm:$0xff] 0.0
      %34 = vst [vmem:[#allocation2 + $0x70] sm:$0xff] 0.0
      %35 = vst [vmem:[#allocation2 + $0x78] sm:$0xff] 0.0
      %36 = vst [vmem:[#allocation2 + $0x80] sm:$0xff] 0.0
      %37 = vst [vmem:[#allocation2 + $0x88] sm:$0xff] 0.0
      %38 = vst [vmem:[#allocation2 + $0x90] sm:$0xff] 0.0
      %39 = vst [vmem:[#allocation2 + $0x98] sm:$0xff] 0.0
      %40 = vst [vmem:[#allocation2 + $0xa0] sm:$0xff] 0.0
      %41 = vst [vmem:[#allocation2 + $0xa8] sm:$0xff] 0.0
      %42 = vst [vmem:[#allocation2 + $0xb0] sm:$0xff] 0.0
      %43 = vst [vmem:[#allocation2 + $0xb8] sm:$0xff] 0.0
      %44 = vst [vmem:[#allocation2 + $0xc0] sm:$0xff] 0.0
      %45 = vst [vmem:[#allocation2 + $0xc8] sm:$0xff] 0.0
      %46 = vst [vmem:[#allocation2 + $0xd0] sm:$0xff] 0.0
      %47 = vst [vmem:[#allocation2 + $0xd8] sm:$0xff] 0.0
      %48 = vst [vmem:[#allocation2 + $0xe0] sm:$0xff] 0.0
      %49 = vst [vmem:[#allocation2 + $0xe8] sm:$0xff] 0.0
      %50 = vst [vmem:[#allocation2 + $0xf0] sm:$0xff] 0.0
      %51 = vst [vmem:[#allocation2 + $0xf8] sm:$0xff] 0.0
      %52 = vst [vmem:[#allocation2 + $0x100] sm:$0xff] 0.0
      %53 = vst [vmem:[#allocation2 + $0x108] sm:$0xff] 0.0
      %54 = vst [vmem:[#allocation2 + $0x110] sm:$0xff] 0.0
      %55 = vst [vmem:[#allocation2 + $0x118] sm:$0xff] 0.0
      %56 = vst [vmem:[#allocation2 + $0x120] sm:$0xff] 0.0
      %57 = vst [vmem:[#allocation2 + $0x128] sm:$0xff] 0.0
      %58 = vst [vmem:[#allocation2 + $0x130] sm:$0xff] 0.0
      %59 = vst [vmem:[#allocation2 + $0x138] sm:$0xff] 0.0
      %60 = vst [vmem:[#allocation2 + $0x140] sm:$0xff] 0.0
      %61 = vst [vmem:[#allocation2 + $0x148] sm:$0xff] 0.0
      %62 = vst [vmem:[#allocation2 + $0x150] sm:$0xff] 0.0
      %63 = vst [vmem:[#allocation2 + $0x158] sm:$0xff] 0.0
      %64 = vst [vmem:[#allocation2 + $0x160] sm:$0xff] 0.0
      %65 = vst [vmem:[#allocation2 + $0x168] sm:$0xff] 0.0
      %66 = vst [vmem:[#allocation2 + $0x170] sm:$0xff] 0.0
      %67 = vst [vmem:[#allocation2 + $0x178] sm:$0xff] 0.0
      %68 = vst [vmem:[#allocation2 + $0x180] sm:$0xff] 0.0
      %69 = vst [vmem:[#allocation2 + $0x188] sm:$0xff] 0.0
      %70 = vst [vmem:[#allocation2 + $0x190] sm:$0xff] 0.0
      %71 = vst [vmem:[#allocation2 + $0x198] sm:$0xff] 0.0
      %72 = vst [vmem:[#allocation2 + $0x1a0] sm:$0xff] 0.0
      %73 = vst [vmem:[#allocation2 + $0x1a8] sm:$0xff] 0.0
      %74 = vst [vmem:[#allocation2 + $0x1b0] sm:$0xff] 0.0
      %75 = vst [vmem:[#allocation2 + $0x1b8] sm:$0xff] 0.0
      %76 = vst [vmem:[#allocation2 + $0x1c0] sm:$0xff] 0.0
      %77 = vst [vmem:[#allocation2 + $0x1c8] sm:$0xff] 0.0
      %78 = vst [vmem:[#allocation2 + $0x1d0] sm:$0xff] 0.0
      %79 = vst [vmem:[#allocation2 + $0x1d8] sm:$0xff] 0.0
      %80 = vst [vmem:[#allocation2 + $0x1e0] sm:$0xff] 0.0
      %81 = vst [vmem:[#allocation2 + $0x1e8] sm:$0xff] 0.0
      %82 = vst [vmem:[#allocation2 + $0x1f0] sm:$0xff] 0.0
      %83 = vst [vmem:[#allocation2 + $0x1f8] sm:$0xff] 0.0
    $region17: #{tpu_custom_call.1} parent=1 // pred_fallthru
      _
    %v84 = vld [vmem:[#allocation2] sm:$0xff]
    %v85 = vld [vmem:[#allocation2 + $0x8] sm:$0xff]
    %v86 = vld [vmem:[#allocation2 + $0x10] sm:$0xff]
    %v87 = vld [vmem:[#allocation2 + $0x18] sm:$0xff]
    %v88 = vld [vmem:[#allocation2 + $0x20] sm:$0xff]
    %v89 = vld [vmem:[#allocation2 + $0x28] sm:$0xff]
    %v90 = vld [vmem:[#allocation2 + $0x30] sm:$0xff]
    %v91 = vld [vmem:[#allocation2 + $0x38] sm:$0xff]
    %v92 = vld [vmem:[#allocation2 + $0x40] sm:$0xff]
    %v93 = vld [vmem:[#allocation2 + $0x48] sm:$0xff]
    %v94 = vld [vmem:[#allocation2 + $0x50] sm:$0xff]
    %v95 = vld [vmem:[#allocation2 + $0x58] sm:$0xff]
    %v96 = vld [vmem:[#allocation2 + $0x60] sm:$0xff]
    %v97 = vld [vmem:[#allocation2 + $0x68] sm:$0xff]
    %v98 = vld [vmem:[#allocation2 + $0x70] sm:$0xff]
    %v99 = vld [vmem:[#allocation2 + $0x78] sm:$0xff]
    %v100 = vld [vmem:[#allocation2 + $0x80] sm:$0xff]
    %v101 = vld [vmem:[#allocation2 + $0x88] sm:$0xff]
    %v102 = vld [vmem:[#allocation2 + $0x90] sm:$0xff]
    %v103 = vld [vmem:[#allocation2 + $0x98] sm:$0xff]
    %v104 = vld [vmem:[#allocation2 + $0xa0] sm:$0xff]
    %v105 = vld [vmem:[#allocation2 + $0xa8] sm:$0xff]
    %v106 = vld [vmem:[#allocation2 + $0xb0] sm:$0xff]
    %v107 = vld [vmem:[#allocation2 + $0xb8] sm:$0xff]
    %v108 = vld [vmem:[#allocation2 + $0xc0] sm:$0xff]
    %v109 = vld [vmem:[#allocation2 + $0xc8] sm:$0xff]
    %v110 = vld [vmem:[#allocation2 + $0xd0] sm:$0xff]
    %v111 = vld [vmem:[#allocation2 + $0xd8] sm:$0xff]
    %v112 = vld [vmem:[#allocation2 + $0xe0] sm:$0xff]
    %v113 = vld [vmem:[#allocation2 + $0xe8] sm:$0xff]
    %v114 = vld [vmem:[#allocation2 + $0xf0] sm:$0xff]
    %v115 = vld [vmem:[#allocation2 + $0xf8] sm:$0xff]
    %v116 = vld [vmem:[#allocation2 + $0x100] sm:$0xff]
    %v117 = vld [vmem:[#allocation2 + $0x108] sm:$0xff]
    %v118 = vld [vmem:[#allocation2 + $0x110] sm:$0xff]
    %v119 = vld [vmem:[#allocation2 + $0x118] sm:$0xff]
    %v120 = vld [vmem:[#allocation2 + $0x120] sm:$0xff]
    %v121 = vld [vmem:[#allocation2 + $0x128] sm:$0xff]
    %v122 = vld [vmem:[#allocation2 + $0x130] sm:$0xff]
    %v123 = vld [vmem:[#allocation2 + $0x138] sm:$0xff]
    %v124 = vld [vmem:[#allocation2 + $0x140] sm:$0xff]
    %v125 = vld [vmem:[#allocation2 + $0x148] sm:$0xff]
    %v126 = vld [vmem:[#allocation2 + $0x150] sm:$0xff]
    %v127 = vld [vmem:[#allocation2 + $0x158] sm:$0xff]
    %v128 = vld [vmem:[#allocation2 + $0x160] sm:$0xff]
    %v129 = vld [vmem:[#allocation2 + $0x168] sm:$0xff]
    %v130 = vld [vmem:[#allocation2 + $0x170] sm:$0xff]
    %v131 = vld [vmem:[#allocation2 + $0x178] sm:$0xff]
    %v132 = vld [vmem:[#allocation2 + $0x180] sm:$0xff]
    %v133 = vld [vmem:[#allocation2 + $0x188] sm:$0xff]
    %v134 = vld [vmem:[#allocation2 + $0x190] sm:$0xff]
    %v135 = vld [vmem:[#allocation2 + $0x198] sm:$0xff]
    %v136 = vld [vmem:[#allocation2 + $0x1a0] sm:$0xff]
    %v137 = vld [vmem:[#allocation2 + $0x1a8] sm:$0xff]
    %v138 = vld [vmem:[#allocation2 + $0x1b0] sm:$0xff]
    %v139 = vld [vmem:[#allocation2 + $0x1b8] sm:$0xff]
    %v140 = vld [vmem:[#allocation2 + $0x1c0] sm:$0xff]
    %v141 = vld [vmem:[#allocation2 + $0x1c8] sm:$0xff]
    %v142 = vld [vmem:[#allocation2 + $0x1d0] sm:$0xff]
    %v143 = vld [vmem:[#allocation2 + $0x1d8] sm:$0xff]
    %v144 = vld [vmem:[#allocation2 + $0x1e0] sm:$0xff]
    %v145 = vld [vmem:[#allocation2 + $0x1e8] sm:$0xff]
    %v146 = vld [vmem:[#allocation2 + $0x1f0] sm:$0xff]
    %v147 = vld [vmem:[#allocation2 + $0x1f8] sm:$0xff]
    %v148 = vld [vmem:[%s0] sm:$0xf]
    %v149 = vld [vmem:[%s0 + $0x4] sm:$0xf]
    %v150 = vld [vmem:[%s0 + $0x8] sm:$0xf]
    %v151 = vld [vmem:[%s0 + $0xc] sm:$0xf]
    %v152 = vld [vmem:[%s0 + $0x10] sm:$0xf]
    %v153 = vld [vmem:[%s0 + $0x14] sm:$0xf]
    %v154 = vld [vmem:[%s0 + $0x18] sm:$0xf]
    %v155 = vld [vmem:[%s0 + $0x1c] sm:$0xf]
    %v156 = vld [vmem:[%s0 + $0x20] sm:$0xf]
    %v157 = vld [vmem:[%s0 + $0x24] sm:$0xf]
    %v158 = vld [vmem:[%s0 + $0x28] sm:$0xf]
    %v159 = vld [vmem:[%s0 + $0x2c] sm:$0xf]
    %v160 = vld [vmem:[%s0 + $0x30] sm:$0xf]
    %v161 = vld [vmem:[%s0 + $0x34] sm:$0xf]
    %v162 = vld [vmem:[%s0 + $0x38] sm:$0xf]
    %v163 = vld [vmem:[%s0 + $0x3c] sm:$0xf]
    %v164 = vld [vmem:[%s0 + $0x40] sm:$0xf]
    %v165 = vld [vmem:[%s0 + $0x44] sm:$0xf]
    %v166 = vld [vmem:[%s0 + $0x48] sm:$0xf]
    %v167 = vld [vmem:[%s0 + $0x4c] sm:$0xf]
    %v168 = vld [vmem:[%s0 + $0x50] sm:$0xf]
    %v169 = vld [vmem:[%s0 + $0x54] sm:$0xf]
    %v170 = vld [vmem:[%s0 + $0x58] sm:$0xf]
    %v171 = vld [vmem:[%s0 + $0x5c] sm:$0xf]
    %v172 = vld [vmem:[%s0 + $0x60] sm:$0xf]
    %v173 = vld [vmem:[%s0 + $0x64] sm:$0xf]
    %v174 = vld [vmem:[%s0 + $0x68] sm:$0xf]
    %v175 = vld [vmem:[%s0 + $0x6c] sm:$0xf]
    %v176 = vld [vmem:[%s0 + $0x70] sm:$0xf]
    %v177 = vld [vmem:[%s0 + $0x74] sm:$0xf]
    %v178 = vld [vmem:[%s0 + $0x78] sm:$0xf]
    %v179 = vld [vmem:[%s0 + $0x7c] sm:$0xf]
    %v180 = vld [vmem:[%s0 + $0x80] sm:$0xf]
    %v181 = vld [vmem:[%s0 + $0x84] sm:$0xf]
    %v182 = vld [vmem:[%s0 + $0x88] sm:$0xf]
    %v183 = vld [vmem:[%s0 + $0x8c] sm:$0xf]
    %v184 = vld [vmem:[%s0 + $0x90] sm:$0xf]
    %v185 = vld [vmem:[%s0 + $0x94] sm:$0xf]
    %v186 = vld [vmem:[%s0 + $0x98] sm:$0xf]
    %v187 = vld [vmem:[%s0 + $0x9c] sm:$0xf]
    %v188 = vld [vmem:[%s0 + $0xa0] sm:$0xf]
    %v189 = vld [vmem:[%s0 + $0xa4] sm:$0xf]
    %v190 = vld [vmem:[%s0 + $0xa8] sm:$0xf]
    %v191 = vld [vmem:[%s0 + $0xac] sm:$0xf]
    %v192 = vld [vmem:[%s0 + $0xb0] sm:$0xf]
    %v193 = vld [vmem:[%s0 + $0xb4] sm:$0xf]
    %v194 = vld [vmem:[%s0 + $0xb8] sm:$0xf]
    %v195 = vld [vmem:[%s0 + $0xbc] sm:$0xf]
    %v196 = vld [vmem:[%s0 + $0xc0] sm:$0xf]
    %v197 = vld [vmem:[%s0 + $0xc4] sm:$0xf]
    %v198 = vld [vmem:[%s0 + $0xc8] sm:$0xf]
    %v199 = vld [vmem:[%s0 + $0xcc] sm:$0xf]
    %v200 = vld [vmem:[%s0 + $0xd0] sm:$0xf]
    %v201 = vld [vmem:[%s0 + $0xd4] sm:$0xf]
    %v202 = vld [vmem:[%s0 + $0xd8] sm:$0xf]
    %v203 = vld [vmem:[%s0 + $0xdc] sm:$0xf]
    %v204 = vld [vmem:[%s0 + $0xe0] sm:$0xf]
    %v205 = vld [vmem:[%s0 + $0xe4] sm:$0xf]
    %v206 = vld [vmem:[%s0 + $0xe8] sm:$0xf]
    %v207 = vld [vmem:[%s0 + $0xec] sm:$0xf]
    %v208 = vld [vmem:[%s0 + $0xf0] sm:$0xf]
    %v209 = vld [vmem:[%s0 + $0xf4] sm:$0xf]
    %v210 = vld [vmem:[%s0 + $0xf8] sm:$0xf]
    %v211 = vld [vmem:[%s0 + $0xfc] sm:$0xf]
    %v212 = vld [vmem:[%s1] sm:$0xf]
    %v213 = vld [vmem:[%s1 + $0x4] sm:$0xf]
    %v214 = vld [vmem:[%s1 + $0x8] sm:$0xf]
    %v215 = vld [vmem:[%s1 + $0xc] sm:$0x3]
    %v280 = vunpack.c.l.b16 %v148
    %v281 = vunpack.c.l.b16 %v149
    %v282 = vunpack.c.l.b16 %v150
    %v283 = vunpack.c.l.b16 %v151
    %v284 = vunpack.c.l.b16 %v152
    %v285 = vunpack.c.l.b16 %v153
    %v286 = vunpack.c.l.b16 %v154
    %v287 = vunpack.c.l.b16 %v155
    %v288 = vunpack.c.l.b16 %v156
    %v289 = vunpack.c.l.b16 %v157
    %v290 = vunpack.c.l.b16 %v158
    %v291 = vunpack.c.l.b16 %v159
    %v292 = vunpack.c.l.b16 %v160
    %v293 = vunpack.c.l.b16 %v161
    %v294 = vunpack.c.l.b16 %v162
    %v295 = vunpack.c.l.b16 %v163
    %v296 = vunpack.c.l.b16 %v164
    %v297 = vunpack.c.l.b16 %v165
    %v298 = vunpack.c.l.b16 %v166
    %v299 = vunpack.c.l.b16 %v167
    %v300 = vunpack.c.l.b16 %v168
    %v301 = vunpack.c.l.b16 %v169
    %v302 = vunpack.c.l.b16 %v170
    %v303 = vunpack.c.l.b16 %v171
    %v304 = vunpack.c.l.b16 %v172
    %v305 = vunpack.c.l.b16 %v173
    %v306 = vunpack.c.l.b16 %v174
    %v307 = vunpack.c.l.b16 %v175
    %v308 = vunpack.c.l.b16 %v176
    %v309 = vunpack.c.l.b16 %v177
    %v310 = vunpack.c.l.b16 %v178
    %v311 = vunpack.c.l.b16 %v179
    %v312 = vunpack.c.l.b16 %v180
    %v313 = vunpack.c.l.b16 %v181
    %v314 = vunpack.c.l.b16 %v182
    %v315 = vunpack.c.l.b16 %v183
    %v316 = vunpack.c.l.b16 %v184
    %v317 = vunpack.c.l.b16 %v185
    %v318 = vunpack.c.l.b16 %v186
    %v319 = vunpack.c.l.b16 %v187
    %v320 = vunpack.c.l.b16 %v188
    %v321 = vunpack.c.l.b16 %v189
    %v322 = vunpack.c.l.b16 %v190
    %v323 = vunpack.c.l.b16 %v191
    %v324 = vunpack.c.l.b16 %v192
    %v325 = vunpack.c.l.b16 %v193
    %v326 = vunpack.c.l.b16 %v194
    %v327 = vunpack.c.l.b16 %v195
    %v328 = vunpack.c.l.b16 %v196
    %v329 = vunpack.c.l.b16 %v197
    %v330 = vunpack.c.l.b16 %v198
    %v331 = vunpack.c.l.b16 %v199
    %v332 = vunpack.c.l.b16 %v200
    %v333 = vunpack.c.l.b16 %v201
    %v334 = vunpack.c.l.b16 %v202
    %v335 = vunpack.c.l.b16 %v203
    %v336 = vunpack.c.l.b16 %v204
    %v337 = vunpack.c.l.b16 %v205
    %v338 = vunpack.c.l.b16 %v206
    %v339 = vunpack.c.l.b16 %v207
    %v340 = vunpack.c.l.b16 %v208
    %v341 = vunpack.c.l.b16 %v209
    %v342 = vunpack.c.l.b16 %v210
    %v343 = vunpack.c.l.b16 %v211
    %v344 = vpack.c.b16 %v281, %v280
    %v345 = vpack.c.b16 %v283, %v282
    %v346 = vpack.c.b16 %v285, %v284
    %v347 = vpack.c.b16 %v287, %v286
    %v348 = vpack.c.b16 %v289, %v288
    %v349 = vpack.c.b16 %v291, %v290
    %v350 = vpack.c.b16 %v293, %v292
    %v351 = vpack.c.b16 %v295, %v294
    %v352 = vpack.c.b16 %v297, %v296
    %v353 = vpack.c.b16 %v299, %v298
    %v354 = vpack.c.b16 %v301, %v300
    %v355 = vpack.c.b16 %v303, %v302
    %v356 = vpack.c.b16 %v305, %v304
    %v357 = vpack.c.b16 %v307, %v306
    %v358 = vpack.c.b16 %v309, %v308
    %v359 = vpack.c.b16 %v311, %v310
    %v360 = vpack.c.b16 %v313, %v312
    %v361 = vpack.c.b16 %v315, %v314
    %v362 = vpack.c.b16 %v317, %v316
    %v363 = vpack.c.b16 %v319, %v318
    %v364 = vpack.c.b16 %v321, %v320
    %v365 = vpack.c.b16 %v323, %v322
    %v366 = vpack.c.b16 %v325, %v324
    %v367 = vpack.c.b16 %v327, %v326
    %v368 = vpack.c.b16 %v329, %v328
    %v369 = vpack.c.b16 %v331, %v330
    %v370 = vpack.c.b16 %v333, %v332
    %v371 = vpack.c.b16 %v335, %v334
    %v372 = vpack.c.b16 %v337, %v336
    %v373 = vpack.c.b16 %v339, %v338
    %v374 = vpack.c.b16 %v341, %v340
    %v375 = vpack.c.b16 %v343, %v342
    %v380 = vunpack.c.l.b16 %v212
    %v381 = vunpack.c.l.b16 %v213
    %v382 = vunpack.c.l.b16 %v214
    %v383 = vunpack.c.l.b16 %v215
    %v384 = vpack.c.b16 %v381, %v380
    %v385 = vpack.c.b16 %v383, %v382
    %vm387 = vcmask 220160
    %v389 = vsel %vm387, %v344, 0
    %v392 = vsel %vm387, %v345, 0
    %v395 = vsel %vm387, %v346, 0
    %v398 = vsel %vm387, %v347, 0
    %v401 = vsel %vm387, %v348, 0
    %v404 = vsel %vm387, %v349, 0
    %v407 = vsel %vm387, %v350, 0
    %v410 = vsel %vm387, %v351, 0
    %v413 = vsel %vm387, %v352, 0
    %v416 = vsel %vm387, %v353, 0
    %v419 = vsel %vm387, %v354, 0
    %v422 = vsel %vm387, %v355, 0
    %v425 = vsel %vm387, %v356, 0
    %v428 = vsel %vm387, %v357, 0
    %v431 = vsel %vm387, %v358, 0
    %v434 = vsel %vm387, %v359, 0
    %v437 = vsel %vm387, %v360, 0
    %v440 = vsel %vm387, %v361, 0
    %v443 = vsel %vm387, %v362, 0
    %v446 = vsel %vm387, %v363, 0
    %v449 = vsel %vm387, %v364, 0
    %v452 = vsel %vm387, %v365, 0
    %v455 = vsel %vm387, %v366, 0
    %v458 = vsel %vm387, %v367, 0
    %v461 = vsel %vm387, %v368, 0
    %v464 = vsel %vm387, %v369, 0
    %v467 = vsel %vm387, %v370, 0
    %v470 = vsel %vm387, %v371, 0
    %v473 = vsel %vm387, %v372, 0
    %v476 = vsel %vm387, %v373, 0
    %v479 = vsel %vm387, %v374, 0
    %v482 = vsel %vm387, %v375, 0
    %vm484 = vcmask 1044480
    %vm485 = vcmask 1045504
    %v486 = vsel %vm484, 4294967295, 65535
    %v487 = vsel %vm485, %v486, 0
    %v489 = vand.u32 %v385, %v487
    %491 = vmatpush.bf16.msra.mxu0 0
    %492 = vmatpush.bf16.msra.mxu0 0
    %493 = vmatpush.bf16.msra.mxu0 0
    %494 = vmatpush.bf16.msra.mxu0 0
    %495 = vmatpush.bf16.msra.mxu0 0
    %496 = vmatpush.bf16.msra.mxu0 0
    %497 = vmatpush.bf16.msra.mxu0 %v489
    %498 = vmatpush.bf16.msra.mxu0 %v384
    %499 = vmatmul.bf16.gmra.mxu0 %v389
    %v500 = vpop.f32.mrf.mxu0
    %v501 = vadd.f32 0.0, %v500
    %v502 = vpop.f32.mrf.mxu0
    %v503 = vadd.f32 0.0, %v502
    %504 = vmatmul.bf16.gmra.mxu0 %v392
    %v505 = vpop.f32.mrf.mxu0
    %v506 = vadd.f32 0.0, %v505
    %v507 = vpop.f32.mrf.mxu0
    %v508 = vadd.f32 0.0, %v507
    %509 = vmatmul.bf16.gmra.mxu0 %v395
    %v510 = vpop.f32.mrf.mxu0
    %v511 = vadd.f32 0.0, %v510
    %v512 = vpop.f32.mrf.mxu0
    %v513 = vadd.f32 0.0, %v512
    %514 = vmatmul.bf16.gmra.mxu0 %v398
    %v515 = vpop.f32.mrf.mxu0
    %v516 = vadd.f32 0.0, %v515
    %v517 = vpop.f32.mrf.mxu0
    %v518 = vadd.f32 0.0, %v517
    %519 = vmatmul.bf16.gmra.mxu0 %v401
    %v520 = vpop.f32.mrf.mxu0
    %v521 = vadd.f32 0.0, %v520
    %v522 = vpop.f32.mrf.mxu0
    %v523 = vadd.f32 0.0, %v522
    %524 = vmatmul.bf16.gmra.mxu0 %v404
    %v525 = vpop.f32.mrf.mxu0
    %v526 = vadd.f32 0.0, %v525
    %v527 = vpop.f32.mrf.mxu0
    %v528 = vadd.f32 0.0, %v527
    %529 = vmatmul.bf16.gmra.mxu0 %v407
    %v530 = vpop.f32.mrf.mxu0
    %v531 = vadd.f32 0.0, %v530
    %v532 = vpop.f32.mrf.mxu0
    %v533 = vadd.f32 0.0, %v532
    %534 = vmatmul.bf16.gmra.mxu0 %v410
    %v535 = vpop.f32.mrf.mxu0
    %v536 = vadd.f32 0.0, %v535
    %v537 = vpop.f32.mrf.mxu0
    %v538 = vadd.f32 0.0, %v537
    %539 = vmatmul.bf16.gmra.mxu0 %v413
    %v540 = vpop.f32.mrf.mxu0
    %v541 = vadd.f32 0.0, %v540
    %v542 = vpop.f32.mrf.mxu0
    %v543 = vadd.f32 0.0, %v542
    %544 = vmatmul.bf16.gmra.mxu0 %v416
    %v545 = vpop.f32.mrf.mxu0
    %v546 = vadd.f32 0.0, %v545
    %v547 = vpop.f32.mrf.mxu0
    %v548 = vadd.f32 0.0, %v547
    %549 = vmatmul.bf16.gmra.mxu0 %v419
    %v550 = vpop.f32.mrf.mxu0
    %v551 = vadd.f32 0.0, %v550
    %v552 = vpop.f32.mrf.mxu0
    %v553 = vadd.f32 0.0, %v552
    %554 = vmatmul.bf16.gmra.mxu0 %v422
    %v555 = vpop.f32.mrf.mxu0
    %v556 = vadd.f32 0.0, %v555
    %v557 = vpop.f32.mrf.mxu0
    %v558 = vadd.f32 0.0, %v557
    %559 = vmatmul.bf16.gmra.mxu0 %v425
    %v560 = vpop.f32.mrf.mxu0
    %v561 = vadd.f32 0.0, %v560
    %v562 = vpop.f32.mrf.mxu0
    %v563 = vadd.f32 0.0, %v562
    %564 = vmatmul.bf16.gmra.mxu0 %v428
    %v565 = vpop.f32.mrf.mxu0
    %v566 = vadd.f32 0.0, %v565
    %v567 = vpop.f32.mrf.mxu0
    %v568 = vadd.f32 0.0, %v567
    %569 = vmatmul.bf16.gmra.mxu0 %v431
    %v570 = vpop.f32.mrf.mxu0
    %v571 = vadd.f32 0.0, %v570
    %v572 = vpop.f32.mrf.mxu0
    %v573 = vadd.f32 0.0, %v572
    %574 = vmatmul.bf16.gmra.mxu0 %v434
    %v575 = vpop.f32.mrf.mxu0
    %v576 = vadd.f32 0.0, %v575
    %v577 = vpop.f32.mrf.mxu0
    %v578 = vadd.f32 0.0, %v577
    %579 = vmatmul.bf16.gmra.mxu0 %v437
    %v580 = vpop.f32.mrf.mxu0
    %v581 = vadd.f32 0.0, %v580
    %v582 = vpop.f32.mrf.mxu0
    %v583 = vadd.f32 0.0, %v582
    %584 = vmatmul.bf16.gmra.mxu0 %v440
    %v585 = vpop.f32.mrf.mxu0
    %v586 = vadd.f32 0.0, %v585
    %v587 = vpop.f32.mrf.mxu0
    %v588 = vadd.f32 0.0, %v587
    %589 = vmatmul.bf16.gmra.mxu0 %v443
    %v590 = vpop.f32.mrf.mxu0
    %v591 = vadd.f32 0.0, %v590
    %v592 = vpop.f32.mrf.mxu0
    %v593 = vadd.f32 0.0, %v592
    %594 = vmatmul.bf16.gmra.mxu0 %v446
    %v595 = vpop.f32.mrf.mxu0
    %v596 = vadd.f32 0.0, %v595
    %v597 = vpop.f32.mrf.mxu0
    %v598 = vadd.f32 0.0, %v597
    %599 = vmatmul.bf16.gmra.mxu0 %v449
    %v600 = vpop.f32.mrf.mxu0
    %v601 = vadd.f32 0.0, %v600
    %v602 = vpop.f32.mrf.mxu0
    %v603 = vadd.f32 0.0, %v602
    %604 = vmatmul.bf16.gmra.mxu0 %v452
    %v605 = vpop.f32.mrf.mxu0
    %v606 = vadd.f32 0.0, %v605
    %v607 = vpop.f32.mrf.mxu0
    %v608 = vadd.f32 0.0, %v607
    %609 = vmatmul.bf16.gmra.mxu0 %v455
    %v610 = vpop.f32.mrf.mxu0
    %v611 = vadd.f32 0.0, %v610
    %v612 = vpop.f32.mrf.mxu0
    %v613 = vadd.f32 0.0, %v612
    %614 = vmatmul.bf16.gmra.mxu0 %v458
    %v615 = vpop.f32.mrf.mxu0
    %v616 = vadd.f32 0.0, %v615
    %v617 = vpop.f32.mrf.mxu0
    %v618 = vadd.f32 0.0, %v617
    %619 = vmatmul.bf16.gmra.mxu0 %v461
    %v620 = vpop.f32.mrf.mxu0
    %v621 = vadd.f32 0.0, %v620
    %v622 = vpop.f32.mrf.mxu0
    %v623 = vadd.f32 0.0, %v622
    %624 = vmatmul.bf16.gmra.mxu0 %v464
    %v625 = vpop.f32.mrf.mxu0
    %v626 = vadd.f32 0.0, %v625
    %v627 = vpop.f32.mrf.mxu0
    %v628 = vadd.f32 0.0, %v627
    %629 = vmatmul.bf16.gmra.mxu0 %v467
    %v630 = vpop.f32.mrf.mxu0
    %v631 = vadd.f32 0.0, %v630
    %v632 = vpop.f32.mrf.mxu0
    %v633 = vadd.f32 0.0, %v632
    %634 = vmatmul.bf16.gmra.mxu0 %v470
    %v635 = vpop.f32.mrf.mxu0
    %v636 = vadd.f32 0.0, %v635
    %v637 = vpop.f32.mrf.mxu0
    %v638 = vadd.f32 0.0, %v637
    %639 = vmatmul.bf16.gmra.mxu0 %v473
    %v640 = vpop.f32.mrf.mxu0
    %v641 = vadd.f32 0.0, %v640
    %v642 = vpop.f32.mrf.mxu0
    %v643 = vadd.f32 0.0, %v642
    %644 = vmatmul.bf16.gmra.mxu0 %v476
    %v645 = vpop.f32.mrf.mxu0
    %v646 = vadd.f32 0.0, %v645
    %v647 = vpop.f32.mrf.mxu0
    %v648 = vadd.f32 0.0, %v647
    %649 = vmatmul.bf16.gmra.mxu0 %v479
    %v650 = vpop.f32.mrf.mxu0
    %v651 = vadd.f32 0.0, %v650
    %v652 = vpop.f32.mrf.mxu0
    %v653 = vadd.f32 0.0, %v652
    %654 = vmatmul.bf16.gmra.mxu0 %v482
    %v655 = vpop.f32.mrf.mxu0
    %v656 = vadd.f32 0.0, %v655
    %v657 = vpop.f32.mrf.mxu0
    %v658 = vadd.f32 0.0, %v657
    %659 = vdwg.mxu0
    %v660 = vadd.f32 %v84, %v501
    %v661 = vadd.f32 %v85, %v503
    %v662 = vadd.f32 %v86, %v506
    %v663 = vadd.f32 %v87, %v508
    %v664 = vadd.f32 %v88, %v511
    %v665 = vadd.f32 %v89, %v513
    %v666 = vadd.f32 %v90, %v516
    %v667 = vadd.f32 %v91, %v518
    %v668 = vadd.f32 %v92, %v521
    %v669 = vadd.f32 %v93, %v523
    %v670 = vadd.f32 %v94, %v526
    %v671 = vadd.f32 %v95, %v528
    %v672 = vadd.f32 %v96, %v531
    %v673 = vadd.f32 %v97, %v533
    %v674 = vadd.f32 %v98, %v536
    %v675 = vadd.f32 %v99, %v538
    %v676 = vadd.f32 %v100, %v541
    %v677 = vadd.f32 %v101, %v543
    %v678 = vadd.f32 %v102, %v546
    %v679 = vadd.f32 %v103, %v548
    %v680 = vadd.f32 %v104, %v551
    %v681 = vadd.f32 %v105, %v553
    %v682 = vadd.f32 %v106, %v556
    %v683 = vadd.f32 %v107, %v558
    %v684 = vadd.f32 %v108, %v561
    %v685 = vadd.f32 %v109, %v563
    %v686 = vadd.f32 %v110, %v566
    %v687 = vadd.f32 %v111, %v568
    %v688 = vadd.f32 %v112, %v571
    %v689 = vadd.f32 %v113, %v573
    %v690 = vadd.f32 %v114, %v576
    %v691 = vadd.f32 %v115, %v578
    %v692 = vadd.f32 %v116, %v581
    %v693 = vadd.f32 %v117, %v583
    %v694 = vadd.f32 %v118, %v586
    %v695 = vadd.f32 %v119, %v588
    %v696 = vadd.f32 %v120, %v591
    %v697 = vadd.f32 %v121, %v593
    %v698 = vadd.f32 %v122, %v596
    %v699 = vadd.f32 %v123, %v598
    %v700 = vadd.f32 %v124, %v601
    %v701 = vadd.f32 %v125, %v603
    %v702 = vadd.f32 %v126, %v606
    %v703 = vadd.f32 %v127, %v608
    %v704 = vadd.f32 %v128, %v611
    %v705 = vadd.f32 %v129, %v613
    %v706 = vadd.f32 %v130, %v616
    %v707 = vadd.f32 %v131, %v618
    %v708 = vadd.f32 %v132, %v621
    %v709 = vadd.f32 %v133, %v623
    %v710 = vadd.f32 %v134, %v626
    %v711 = vadd.f32 %v135, %v628
    %v712 = vadd.f32 %v136, %v631
    %v713 = vadd.f32 %v137, %v633
    %v714 = vadd.f32 %v138, %v636
    %v715 = vadd.f32 %v139, %v638
    %v716 = vadd.f32 %v140, %v641
    %v717 = vadd.f32 %v141, %v643
    %v718 = vadd.f32 %v142, %v646
    %v719 = vadd.f32 %v143, %v648
    %v720 = vadd.f32 %v144, %v651
    %v721 = vadd.f32 %v145, %v653
    %v722 = vadd.f32 %v146, %v656
    %v723 = vadd.f32 %v147, %v658
    %724 = vst [vmem:[#allocation2] sm:$0xff] %v660
    %725 = vst [vmem:[#allocation2 + $0x8] sm:$0xff] %v661
    %726 = vst [vmem:[#allocation2 + $0x10] sm:$0xff] %v662
    %727 = vst [vmem:[#allocation2 + $0x18] sm:$0xff] %v663
    %728 = vst [vmem:[#allocation2 + $0x20] sm:$0xff] %v664
    %729 = vst [vmem:[#allocation2 + $0x28] sm:$0xff] %v665
    %730 = vst [vmem:[#allocation2 + $0x30] sm:$0xff] %v666
    %731 = vst [vmem:[#allocation2 + $0x38] sm:$0xff] %v667
    %732 = vst [vmem:[#allocation2 + $0x40] sm:$0xff] %v668
    %733 = vst [vmem:[#allocation2 + $0x48] sm:$0xff] %v669
    %734 = vst [vmem:[#allocation2 + $0x50] sm:$0xff] %v670
    %735 = vst [vmem:[#allocation2 + $0x58] sm:$0xff] %v671
    %736 = vst [vmem:[#allocation2 + $0x60] sm:$0xff] %v672
    %737 = vst [vmem:[#allocation2 + $0x68] sm:$0xff] %v673
    %738 = vst [vmem:[#allocation2 + $0x70] sm:$0xff] %v674
    %739 = vst [vmem:[#allocation2 + $0x78] sm:$0xff] %v675
    %740 = vst [vmem:[#allocation2 + $0x80] sm:$0xff] %v676
    %741 = vst [vmem:[#allocation2 + $0x88] sm:$0xff] %v677
    %742 = vst [vmem:[#allocation2 + $0x90] sm:$0xff] %v678
    %743 = vst [vmem:[#allocation2 + $0x98] sm:$0xff] %v679
    %744 = vst [vmem:[#allocation2 + $0xa0] sm:$0xff] %v680
    %745 = vst [vmem:[#allocation2 + $0xa8] sm:$0xff] %v681
    %746 = vst [vmem:[#allocation2 + $0xb0] sm:$0xff] %v682
    %747 = vst [vmem:[#allocation2 + $0xb8] sm:$0xff] %v683
    %748 = vst [vmem:[#allocation2 + $0xc0] sm:$0xff] %v684
    %749 = vst [vmem:[#allocation2 + $0xc8] sm:$0xff] %v685
    %750 = vst [vmem:[#allocation2 + $0xd0] sm:$0xff] %v686
    %751 = vst [vmem:[#allocation2 + $0xd8] sm:$0xff] %v687
    %752 = vst [vmem:[#allocation2 + $0xe0] sm:$0xff] %v688
    %753 = vst [vmem:[#allocation2 + $0xe8] sm:$0xff] %v689
    %754 = vst [vmem:[#allocation2 + $0xf0] sm:$0xff] %v690
    %755 = vst [vmem:[#allocation2 + $0xf8] sm:$0xff] %v691
    %756 = vst [vmem:[#allocation2 + $0x100] sm:$0xff] %v692
    %757 = vst [vmem:[#allocation2 + $0x108] sm:$0xff] %v693
    %758 = vst [vmem:[#allocation2 + $0x110] sm:$0xff] %v694
    %759 = vst [vmem:[#allocation2 + $0x118] sm:$0xff] %v695
    %760 = vst [vmem:[#allocation2 + $0x120] sm:$0xff] %v696
    %761 = vst [vmem:[#allocation2 + $0x128] sm:$0xff] %v697
    %762 = vst [vmem:[#allocation2 + $0x130] sm:$0xff] %v698
    %763 = vst [vmem:[#allocation2 + $0x138] sm:$0xff] %v699
    %764 = vst [vmem:[#allocation2 + $0x140] sm:$0xff] %v700
    %765 = vst [vmem:[#allocation2 + $0x148] sm:$0xff] %v701
    %766 = vst [vmem:[#allocation2 + $0x150] sm:$0xff] %v702
    %767 = vst [vmem:[#allocation2 + $0x158] sm:$0xff] %v703
    %768 = vst [vmem:[#allocation2 + $0x160] sm:$0xff] %v704
    %769 = vst [vmem:[#allocation2 + $0x168] sm:$0xff] %v705
    %770 = vst [vmem:[#allocation2 + $0x170] sm:$0xff] %v706
    %771 = vst [vmem:[#allocation2 + $0x178] sm:$0xff] %v707
    %772 = vst [vmem:[#allocation2 + $0x180] sm:$0xff] %v708
    %773 = vst [vmem:[#allocation2 + $0x188] sm:$0xff] %v709
    %774 = vst [vmem:[#allocation2 + $0x190] sm:$0xff] %v710
    %775 = vst [vmem:[#allocation2 + $0x198] sm:$0xff] %v711
    %776 = vst [vmem:[#allocation2 + $0x1a0] sm:$0xff] %v712
    %777 = vst [vmem:[#allocation2 + $0x1a8] sm:$0xff] %v713
    %778 = vst [vmem:[#allocation2 + $0x1b0] sm:$0xff] %v714
    %779 = vst [vmem:[#allocation2 + $0x1b8] sm:$0xff] %v715
    %780 = vst [vmem:[#allocation2 + $0x1c0] sm:$0xff] %v716
    %781 = vst [vmem:[#allocation2 + $0x1c8] sm:$0xff] %v717
    %782 = vst [vmem:[#allocation2 + $0x1d0] sm:$0xff] %v718
    %783 = vst [vmem:[#allocation2 + $0x1d8] sm:$0xff] %v719
    %784 = vst [vmem:[#allocation2 + $0x1e0] sm:$0xff] %v720
    %785 = vst [vmem:[#allocation2 + $0x1e8] sm:$0xff] %v721
    %786 = vst [vmem:[#allocation2 + $0x1f0] sm:$0xff] %v722
    %787 = vst [vmem:[#allocation2 + $0x1f8] sm:$0xff] %v723
    // Predicated region
    $region18: #{tpu_custom_call.1} parent=1 // pred_check
      %p788 = pneg %p16
    $region19: #{tpu_custom_call.1} parent=1 // pred_check_branch
      %790 = sbr.rel (%p788) target = $region21
    $region20: #{tpu_custom_call.1} parent=1 // pred_region
      %v791 = vld [vmem:[#allocation2] sm:$0xff]
      %v792 = vld [vmem:[#allocation2 + $0x8] sm:$0xff]
      %v793 = vld [vmem:[#allocation2 + $0x10] sm:$0xff]
      %v794 = vld [vmem:[#allocation2 + $0x18] sm:$0xff]
      %v795 = vld [vmem:[#allocation2 + $0x20] sm:$0xff]
      %v796 = vld [vmem:[#allocation2 + $0x28] sm:$0xff]
      %v797 = vld [vmem:[#allocation2 + $0x30] sm:$0xff]
      %v798 = vld [vmem:[#allocation2 + $0x38] sm:$0xff]
      %v799 = vld [vmem:[#allocation2 + $0x40] sm:$0xff]
      %v800 = vld [vmem:[#allocation2 + $0x48] sm:$0xff]
      %v801 = vld [vmem:[#allocation2 + $0x50] sm:$0xff]
      %v802 = vld [vmem:[#allocation2 + $0x58] sm:$0xff]
      %v803 = vld [vmem:[#allocation2 + $0x60] sm:$0xff]
      %v804 = vld [vmem:[#allocation2 + $0x68] sm:$0xff]
      %v805 = vld [vmem:[#allocation2 + $0x70] sm:$0xff]
      %v806 = vld [vmem:[#allocation2 + $0x78] sm:$0xff]
      %v807 = vld [vmem:[#allocation2 + $0x80] sm:$0xff]
      %v808 = vld [vmem:[#allocation2 + $0x88] sm:$0xff]
      %v809 = vld [vmem:[#allocation2 + $0x90] sm:$0xff]
      %v810 = vld [vmem:[#allocation2 + $0x98] sm:$0xff]
      %v811 = vld [vmem:[#allocation2 + $0xa0] sm:$0xff]
      %v812 = vld [vmem:[#allocation2 + $0xa8] sm:$0xff]
      %v813 = vld [vmem:[#allocation2 + $0xb0] sm:$0xff]
      %v814 = vld [vmem:[#allocation2 + $0xb8] sm:$0xff]
      %v815 = vld [vmem:[#allocation2 + $0xc0] sm:$0xff]
      %v816 = vld [vmem:[#allocation2 + $0xc8] sm:$0xff]
      %v817 = vld [vmem:[#allocation2 + $0xd0] sm:$0xff]
      %v818 = vld [vmem:[#allocation2 + $0xd8] sm:$0xff]
      %v819 = vld [vmem:[#allocation2 + $0xe0] sm:$0xff]
      %v820 = vld [vmem:[#allocation2 + $0xe8] sm:$0xff]
      %v821 = vld [vmem:[#allocation2 + $0xf0] sm:$0xff]
      %v822 = vld [vmem:[#allocation2 + $0xf8] sm:$0xff]
      %v823 = vld [vmem:[#allocation2 + $0x100] sm:$0xff]
      %v824 = vld [vmem:[#allocation2 + $0x108] sm:$0xff]
      %v825 = vld [vmem:[#allocation2 + $0x110] sm:$0xff]
      %v826 = vld [vmem:[#allocation2 + $0x118] sm:$0xff]
      %v827 = vld [vmem:[#allocation2 + $0x120] sm:$0xff]
      %v828 = vld [vmem:[#allocation2 + $0x128] sm:$0xff]
      %v829 = vld [vmem:[#allocation2 + $0x130] sm:$0xff]
      %v830 = vld [vmem:[#allocation2 + $0x138] sm:$0xff]
      %v831 = vld [vmem:[#allocation2 + $0x140] sm:$0xff]
      %v832 = vld [vmem:[#allocation2 + $0x148] sm:$0xff]
      %v833 = vld [vmem:[#allocation2 + $0x150] sm:$0xff]
      %v834 = vld [vmem:[#allocation2 + $0x158] sm:$0xff]
      %v835 = vld [vmem:[#allocation2 + $0x160] sm:$0xff]
      %v836 = vld [vmem:[#allocation2 + $0x168] sm:$0xff]
      %v837 = vld [vmem:[#allocation2 + $0x170] sm:$0xff]
      %v838 = vld [vmem:[#allocation2 + $0x178] sm:$0xff]
      %v839 = vld [vmem:[#allocation2 + $0x180] sm:$0xff]
      %v840 = vld [vmem:[#allocation2 + $0x188] sm:$0xff]
      %v841 = vld [vmem:[#allocation2 + $0x190] sm:$0xff]
      %v842 = vld [vmem:[#allocation2 + $0x198] sm:$0xff]
      %v843 = vld [vmem:[#allocation2 + $0x1a0] sm:$0xff]
      %v844 = vld [vmem:[#allocation2 + $0x1a8] sm:$0xff]
      %v845 = vld [vmem:[#allocation2 + $0x1b0] sm:$0xff]
      %v846 = vld [vmem:[#allocation2 + $0x1b8] sm:$0xff]
      %v847 = vld [vmem:[#allocation2 + $0x1c0] sm:$0xff]
      %v848 = vld [vmem:[#allocation2 + $0x1c8] sm:$0xff]
      %v849 = vld [vmem:[#allocation2 + $0x1d0] sm:$0xff]
      %v850 = vld [vmem:[#allocation2 + $0x1d8] sm:$0xff]
      %v851 = vld [vmem:[#allocation2 + $0x1e0] sm:$0xff]
      %v852 = vld [vmem:[#allocation2 + $0x1e8] sm:$0xff]
      %v853 = vld [vmem:[#allocation2 + $0x1f0] sm:$0xff]
      %v854 = vld [vmem:[#allocation2 + $0x1f8] sm:$0xff]
      %v855 = vld [vmem:[%s2] sm:$0x1]
      %v857 = vperm.slane %v855, 0
      %v859 = vadd.f32 %v791, %v857
      %v860 = vadd.f32 %v792, %v857
      %v861 = vadd.f32 %v793, %v857
      %v862 = vadd.f32 %v794, %v857
      %v863 = vadd.f32 %v795, %v857
      %v864 = vadd.f32 %v796, %v857
      %v865 = vadd.f32 %v797, %v857
      %v866 = vadd.f32 %v798, %v857
      %v867 = vadd.f32 %v799, %v857
      %v868 = vadd.f32 %v800, %v857
      %v869 = vadd.f32 %v801, %v857
      %v870 = vadd.f32 %v802, %v857
      %v871 = vadd.f32 %v803, %v857
      %v872 = vadd.f32 %v804, %v857
      %v873 = vadd.f32 %v805, %v857
      %v874 = vadd.f32 %v806, %v857
      %v875 = vadd.f32 %v807, %v857
      %v876 = vadd.f32 %v808, %v857
      %v877 = vadd.f32 %v809, %v857
      %v878 = vadd.f32 %v810, %v857
      %v879 = vadd.f32 %v811, %v857
      %v880 = vadd.f32 %v812, %v857
      %v881 = vadd.f32 %v813, %v857
      %v882 = vadd.f32 %v814, %v857
      %v883 = vadd.f32 %v815, %v857
      %v884 = vadd.f32 %v816, %v857
      %v885 = vadd.f32 %v817, %v857
      %v886 = vadd.f32 %v818, %v857
      %v887 = vadd.f32 %v819, %v857
      %v888 = vadd.f32 %v820, %v857
      %v889 = vadd.f32 %v821, %v857
      %v890 = vadd.f32 %v822, %v857
      %v891 = vadd.f32 %v823, %v857
      %v892 = vadd.f32 %v824, %v857
      %v893 = vadd.f32 %v825, %v857
      %v894 = vadd.f32 %v826, %v857
      %v895 = vadd.f32 %v827, %v857
      %v896 = vadd.f32 %v828, %v857
      %v897 = vadd.f32 %v829, %v857
      %v898 = vadd.f32 %v830, %v857
      %v899 = vadd.f32 %v831, %v857
      %v900 = vadd.f32 %v832, %v857
      %v901 = vadd.f32 %v833, %v857
      %v902 = vadd.f32 %v834, %v857
      %v903 = vadd.f32 %v835, %v857
      %v904 = vadd.f32 %v836, %v857
      %v905 = vadd.f32 %v837, %v857
      %v906 = vadd.f32 %v838, %v857
      %v907 = vadd.f32 %v839, %v857
      %v908 = vadd.f32 %v840, %v857
      %v909 = vadd.f32 %v841, %v857
      %v910 = vadd.f32 %v842, %v857
      %v911 = vadd.f32 %v843, %v857
      %v912 = vadd.f32 %v844, %v857
      %v913 = vadd.f32 %v845, %v857
      %v914 = vadd.f32 %v846, %v857
      %v915 = vadd.f32 %v847, %v857
      %v916 = vadd.f32 %v848, %v857
      %v917 = vadd.f32 %v849, %v857
      %v918 = vadd.f32 %v850, %v857
      %v919 = vadd.f32 %v851, %v857
      %v920 = vadd.f32 %v852, %v857
      %v921 = vadd.f32 %v853, %v857
      %v922 = vadd.f32 %v854, %v857
      %v923 = vmax.f32 %v859, 0.0
      %v924 = vmax.f32 %v860, 0.0
      %v925 = vmax.f32 %v861, 0.0
      %v926 = vmax.f32 %v862, 0.0
      %v927 = vmax.f32 %v863, 0.0
      %v928 = vmax.f32 %v864, 0.0
      %v929 = vmax.f32 %v865, 0.0
      %v930 = vmax.f32 %v866, 0.0
      %v931 = vmax.f32 %v867, 0.0
      %v932 = vmax.f32 %v868, 0.0
      %v933 = vmax.f32 %v869, 0.0
      %v934 = vmax.f32 %v870, 0.0
      %v935 = vmax.f32 %v871, 0.0
      %v936 = vmax.f32 %v872, 0.0
      %v937 = vmax.f32 %v873, 0.0
      %v938 = vmax.f32 %v874, 0.0
      %v939 = vmax.f32 %v875, 0.0
      %v940 = vmax.f32 %v876, 0.0
      %v941 = vmax.f32 %v877, 0.0
      %v942 = vmax.f32 %v878, 0.0
      %v943 = vmax.f32 %v879, 0.0
      %v944 = vmax.f32 %v880, 0.0
      %v945 = vmax.f32 %v881, 0.0
      %v946 = vmax.f32 %v882, 0.0
      %v947 = vmax.f32 %v883, 0.0
      %v948 = vmax.f32 %v884, 0.0
      %v949 = vmax.f32 %v885, 0.0
      %v950 = vmax.f32 %v886, 0.0
      %v951 = vmax.f32 %v887, 0.0
      %v952 = vmax.f32 %v888, 0.0
      %v953 = vmax.f32 %v889, 0.0
      %v954 = vmax.f32 %v890, 0.0
      %v955 = vmax.f32 %v891, 0.0
      %v956 = vmax.f32 %v892, 0.0
      %v957 = vmax.f32 %v893, 0.0
      %v958 = vmax.f32 %v894, 0.0
      %v959 = vmax.f32 %v895, 0.0
      %v960 = vmax.f32 %v896, 0.0
      %v961 = vmax.f32 %v897, 0.0
      %v962 = vmax.f32 %v898, 0.0
      %v963 = vmax.f32 %v899, 0.0
      %v964 = vmax.f32 %v900, 0.0
      %v965 = vmax.f32 %v901, 0.0
      %v966 = vmax.f32 %v902, 0.0
      %v967 = vmax.f32 %v903, 0.0
      %v968 = vmax.f32 %v904, 0.0
      %v969 = vmax.f32 %v905, 0.0
      %v970 = vmax.f32 %v906, 0.0
      %v971 = vmax.f32 %v907, 0.0
      %v972 = vmax.f32 %v908, 0.0
      %v973 = vmax.f32 %v909, 0.0
      %v974 = vmax.f32 %v910, 0.0
      %v975 = vmax.f32 %v911, 0.0
      %v976 = vmax.f32 %v912, 0.0
      %v977 = vmax.f32 %v913, 0.0
      %v978 = vmax.f32 %v914, 0.0
      %v979 = vmax.f32 %v915, 0.0
      %v980 = vmax.f32 %v916, 0.0
      %v981 = vmax.f32 %v917, 0.0
      %v982 = vmax.f32 %v918, 0.0
      %v983 = vmax.f32 %v919, 0.0
      %v984 = vmax.f32 %v920, 0.0
      %v985 = vmax.f32 %v921, 0.0
      %v986 = vmax.f32 %v922, 0.0
      %v987 = vmin.f32 %v923, 6.0
      %v988 = vmin.f32 %v924, 6.0
      %v989 = vmin.f32 %v925, 6.0
      %v990 = vmin.f32 %v926, 6.0
      %v991 = vmin.f32 %v927, 6.0
      %v992 = vmin.f32 %v928, 6.0
      %v993 = vmin.f32 %v929, 6.0
      %v994 = vmin.f32 %v930, 6.0
      %v995 = vmin.f32 %v931, 6.0
      %v996 = vmin.f32 %v932, 6.0
      %v997 = vmin.f32 %v933, 6.0
      %v998 = vmin.f32 %v934, 6.0
      %v999 = vmin.f32 %v935, 6.0
      %v1000 = vmin.f32 %v936, 6.0
      %v1001 = vmin.f32 %v937, 6.0
      %v1002 = vmin.f32 %v938, 6.0
      %v1003 = vmin.f32 %v939, 6.0
      %v1004 = vmin.f32 %v940, 6.0
      %v1005 = vmin.f32 %v941, 6.0
      %v1006 = vmin.f32 %v942, 6.0
      %v1007 = vmin.f32 %v943, 6.0
      %v1008 = vmin.f32 %v944, 6.0
      %v1009 = vmin.f32 %v945, 6.0
      %v1010 = vmin.f32 %v946, 6.0
      %v1011 = vmin.f32 %v947, 6.0
      %v1012 = vmin.f32 %v948, 6.0
      %v1013 = vmin.f32 %v949, 6.0
      %v1014 = vmin.f32 %v950, 6.0
      %v1015 = vmin.f32 %v951, 6.0
      %v1016 = vmin.f32 %v952, 6.0
      %v1017 = vmin.f32 %v953, 6.0
      %v1018 = vmin.f32 %v954, 6.0
      %v1019 = vmin.f32 %v955, 6.0
      %v1020 = vmin.f32 %v956, 6.0
      %v1021 = vmin.f32 %v957, 6.0
      %v1022 = vmin.f32 %v958, 6.0
      %v1023 = vmin.f32 %v959, 6.0
      %v1024 = vmin.f32 %v960, 6.0
      %v1025 = vmin.f32 %v961, 6.0
      %v1026 = vmin.f32 %v962, 6.0
      %v1027 = vmin.f32 %v963, 6.0
      %v1028 = vmin.f32 %v964, 6.0
      %v1029 = vmin.f32 %v965, 6.0
      %v1030 = vmin.f32 %v966, 6.0
      %v1031 = vmin.f32 %v967, 6.0
      %v1032 = vmin.f32 %v968, 6.0
      %v1033 = vmin.f32 %v969, 6.0
      %v1034 = vmin.f32 %v970, 6.0
      %v1035 = vmin.f32 %v971, 6.0
      %v1036 = vmin.f32 %v972, 6.0
      %v1037 = vmin.f32 %v973, 6.0
      %v1038 = vmin.f32 %v974, 6.0
      %v1039 = vmin.f32 %v975, 6.0
      %v1040 = vmin.f32 %v976, 6.0
      %v1041 = vmin.f32 %v977, 6.0
      %v1042 = vmin.f32 %v978, 6.0
      %v1043 = vmin.f32 %v979, 6.0
      %v1044 = vmin.f32 %v980, 6.0
      %v1045 = vmin.f32 %v981, 6.0
      %v1046 = vmin.f32 %v982, 6.0
      %v1047 = vmin.f32 %v983, 6.0
      %v1048 = vmin.f32 %v984, 6.0
      %v1049 = vmin.f32 %v985, 6.0
      %v1050 = vmin.f32 %v986, 6.0
      %v1051 = vpack.c.bf16 %v987, %v987
      %v1052 = vpack.c.bf16 %v988, %v988
      %v1053 = vpack.c.bf16 %v989, %v989
      %v1054 = vpack.c.bf16 %v990, %v990
      %v1055 = vpack.c.bf16 %v991, %v991
      %v1056 = vpack.c.bf16 %v992, %v992
      %v1057 = vpack.c.bf16 %v993, %v993
      %v1058 = vpack.c.bf16 %v994, %v994
      %v1059 = vpack.c.bf16 %v995, %v995
      %v1060 = vpack.c.bf16 %v996, %v996
      %v1061 = vpack.c.bf16 %v997, %v997
      %v1062 = vpack.c.bf16 %v998, %v998
      %v1063 = vpack.c.bf16 %v999, %v999
      %v1064 = vpack.c.bf16 %v1000, %v1000
      %v1065 = vpack.c.bf16 %v1001, %v1001
      %v1066 = vpack.c.bf16 %v1002, %v1002
      %v1067 = vpack.c.bf16 %v1003, %v1003
      %v1068 = vpack.c.bf16 %v1004, %v1004
      %v1069 = vpack.c.bf16 %v1005, %v1005
      %v1070 = vpack.c.bf16 %v1006, %v1006
      %v1071 = vpack.c.bf16 %v1007, %v1007
      %v1072 = vpack.c.bf16 %v1008, %v1008
      %v1073 = vpack.c.bf16 %v1009, %v1009
      %v1074 = vpack.c.bf16 %v1010, %v1010
      %v1075 = vpack.c.bf16 %v1011, %v1011
      %v1076 = vpack.c.bf16 %v1012, %v1012
      %v1077 = vpack.c.bf16 %v1013, %v1013
      %v1078 = vpack.c.bf16 %v1014, %v1014
      %v1079 = vpack.c.bf16 %v1015, %v1015
      %v1080 = vpack.c.bf16 %v1016, %v1016
      %v1081 = vpack.c.bf16 %v1017, %v1017
      %v1082 = vpack.c.bf16 %v1018, %v1018
      %v1083 = vpack.c.bf16 %v1019, %v1019
      %v1084 = vpack.c.bf16 %v1020, %v1020
      %v1085 = vpack.c.bf16 %v1021, %v1021
      %v1086 = vpack.c.bf16 %v1022, %v1022
      %v1087 = vpack.c.bf16 %v1023, %v1023
      %v1088 = vpack.c.bf16 %v1024, %v1024
      %v1089 = vpack.c.bf16 %v1025, %v1025
      %v1090 = vpack.c.bf16 %v1026, %v1026
      %v1091 = vpack.c.bf16 %v1027, %v1027
      %v1092 = vpack.c.bf16 %v1028, %v1028
      %v1093 = vpack.c.bf16 %v1029, %v1029
      %v1094 = vpack.c.bf16 %v1030, %v1030
      %v1095 = vpack.c.bf16 %v1031, %v1031
      %v1096 = vpack.c.bf16 %v1032, %v1032
      %v1097 = vpack.c.bf16 %v1033, %v1033
      %v1098 = vpack.c.bf16 %v1034, %v1034
      %v1099 = vpack.c.bf16 %v1035, %v1035
      %v1100 = vpack.c.bf16 %v1036, %v1036
      %v1101 = vpack.c.bf16 %v1037, %v1037
      %v1102 = vpack.c.bf16 %v1038, %v1038
      %v1103 = vpack.c.bf16 %v1039, %v1039
      %v1104 = vpack.c.bf16 %v1040, %v1040
      %v1105 = vpack.c.bf16 %v1041, %v1041
      %v1106 = vpack.c.bf16 %v1042, %v1042
      %v1107 = vpack.c.bf16 %v1043, %v1043
      %v1108 = vpack.c.bf16 %v1044, %v1044
      %v1109 = vpack.c.bf16 %v1045, %v1045
      %v1110 = vpack.c.bf16 %v1046, %v1046
      %v1111 = vpack.c.bf16 %v1047, %v1047
      %v1112 = vpack.c.bf16 %v1048, %v1048
      %v1113 = vpack.c.bf16 %v1049, %v1049
      %v1114 = vpack.c.bf16 %v1050, %v1050
      %1115 = vst [vmem:[#allocation3] sm:$0xf] %v1051
      %1116 = vst [vmem:[#allocation3 + $0x4] sm:$0xf] %v1052
      %1117 = vst [vmem:[#allocation3 + $0x8] sm:$0xf] %v1053
      %1118 = vst [vmem:[#allocation3 + $0xc] sm:$0xf] %v1054
      %1119 = vst [vmem:[#allocation3 + $0x10] sm:$0xf] %v1055
      %1120 = vst [vmem:[#allocation3 + $0x14] sm:$0xf] %v1056
      %1121 = vst [vmem:[#allocation3 + $0x18] sm:$0xf] %v1057
      %1122 = vst [vmem:[#allocation3 + $0x1c] sm:$0xf] %v1058
      %1123 = vst [vmem:[#allocation3 + $0x20] sm:$0xf] %v1059
      %1124 = vst [vmem:[#allocation3 + $0x24] sm:$0xf] %v1060
      %1125 = vst [vmem:[#allocation3 + $0x28] sm:$0xf] %v1061
      %1126 = vst [vmem:[#allocation3 + $0x2c] sm:$0xf] %v1062
      %1127 = vst [vmem:[#allocation3 + $0x30] sm:$0xf] %v1063
      %1128 = vst [vmem:[#allocation3 + $0x34] sm:$0xf] %v1064
      %1129 = vst [vmem:[#allocation3 + $0x38] sm:$0xf] %v1065
      %1130 = vst [vmem:[#allocation3 + $0x3c] sm:$0xf] %v1066
      %1131 = vst [vmem:[#allocation3 + $0x40] sm:$0xf] %v1067
      %1132 = vst [vmem:[#allocation3 + $0x44] sm:$0xf] %v1068
      %1133 = vst [vmem:[#allocation3 + $0x48] sm:$0xf] %v1069
      %1134 = vst [vmem:[#allocation3 + $0x4c] sm:$0xf] %v1070
      %1135 = vst [vmem:[#allocation3 + $0x50] sm:$0xf] %v1071
      %1136 = vst [vmem:[#allocation3 + $0x54] sm:$0xf] %v1072
      %1137 = vst [vmem:[#allocation3 + $0x58] sm:$0xf] %v1073
      %1138 = vst [vmem:[#allocation3 + $0x5c] sm:$0xf] %v1074
      %1139 = vst [vmem:[#allocation3 + $0x60] sm:$0xf] %v1075
      %1140 = vst [vmem:[#allocation3 + $0x64] sm:$0xf] %v1076
      %1141 = vst [vmem:[#allocation3 + $0x68] sm:$0xf] %v1077
      %1142 = vst [vmem:[#allocation3 + $0x6c] sm:$0xf] %v1078
      %1143 = vst [vmem:[#allocation3 + $0x70] sm:$0xf] %v1079
      %1144 = vst [vmem:[#allocation3 + $0x74] sm:$0xf] %v1080
      %1145 = vst [vmem:[#allocation3 + $0x78] sm:$0xf] %v1081
      %1146 = vst [vmem:[#allocation3 + $0x7c] sm:$0xf] %v1082
      %1147 = vst [vmem:[#allocation3 + $0x80] sm:$0xf] %v1083
      %1148 = vst [vmem:[#allocation3 + $0x84] sm:$0xf] %v1084
      %1149 = vst [vmem:[#allocation3 + $0x88] sm:$0xf] %v1085
      %1150 = vst [vmem:[#allocation3 + $0x8c] sm:$0xf] %v1086
      %1151 = vst [vmem:[#allocation3 + $0x90] sm:$0xf] %v1087
      %1152 = vst [vmem:[#allocation3 + $0x94] sm:$0xf] %v1088
      %1153 = vst [vmem:[#allocation3 + $0x98] sm:$0xf] %v1089
      %1154 = vst [vmem:[#allocation3 + $0x9c] sm:$0xf] %v1090
      %1155 = vst [vmem:[#allocation3 + $0xa0] sm:$0xf] %v1091
      %1156 = vst [vmem:[#allocation3 + $0xa4] sm:$0xf] %v1092
      %1157 = vst [vmem:[#allocation3 + $0xa8] sm:$0xf] %v1093
      %1158 = vst [vmem:[#allocation3 + $0xac] sm:$0xf] %v1094
      %1159 = vst [vmem:[#allocation3 + $0xb0] sm:$0xf] %v1095
      %1160 = vst [vmem:[#allocation3 + $0xb4] sm:$0xf] %v1096
      %1161 = vst [vmem:[#allocation3 + $0xb8] sm:$0xf] %v1097
      %1162 = vst [vmem:[#allocation3 + $0xbc] sm:$0xf] %v1098
      %1163 = vst [vmem:[#allocation3 + $0xc0] sm:$0xf] %v1099
      %1164 = vst [vmem:[#allocation3 + $0xc4] sm:$0xf] %v1100
      %1165 = vst [vmem:[#allocation3 + $0xc8] sm:$0xf] %v1101
      %1166 = vst [vmem:[#allocation3 + $0xcc] sm:$0xf] %v1102
      %1167 = vst [vmem:[#allocation3 + $0xd0] sm:$0xf] %v1103
      %1168 = vst [vmem:[#allocation3 + $0xd4] sm:$0xf] %v1104
      %1169 = vst [vmem:[#allocation3 + $0xd8] sm:$0xf] %v1105
      %1170 = vst [vmem:[#allocation3 + $0xdc] sm:$0xf] %v1106
      %1171 = vst [vmem:[#allocation3 + $0xe0] sm:$0xf] %v1107
      %1172 = vst [vmem:[#allocation3 + $0xe4] sm:$0xf] %v1108
      %1173 = vst [vmem:[#allocation3 + $0xe8] sm:$0xf] %v1109
      %1174 = vst [vmem:[#allocation3 + $0xec] sm:$0xf] %v1110
      %1175 = vst [vmem:[#allocation3 + $0xf0] sm:$0xf] %v1111
      %1176 = vst [vmem:[#allocation3 + $0xf4] sm:$0xf] %v1112
      %1177 = vst [vmem:[#allocation3 + $0xf8] sm:$0xf] %v1113
      %1178 = vst [vmem:[#allocation3 + $0xfc] sm:$0xf] %v1114
    $region21: #{tpu_custom_call.1} parent=1 // pred_fallthru
      _
    // Predicated region
    $region22: #{tpu_custom_call.1} parent=1 // pred_check
      _
    $region23: #{tpu_custom_call.1} parent=1 // pred_check_branch
      %1180 = sbr.rel (0) target = $region25
    $region24: #{tpu_custom_call.1} parent=1 // pred_region
      %1182 = vsyncadd [#allocation4], 0
      %s1183 = sshll.u32 [#allocation3], 4
      %s1184 = int_to_ptr.vmem [resolvable:$true] %s1183
      %s1185 = sshll.u32 %s3, 4
      %s1186 = int_to_ptr.hbm [resolvable:$true] %s1185
      %1191 = dma.vmem_to_hbm [thread:$0]  %s1184, 4096, %s1186, [#allocation4], 64, 64, 4
    $region25: #{tpu_custom_call.1} parent=1 // pred_fallthru
      _
    // Predicated region
    $region26: #{tpu_custom_call.1} parent=1 // pred_check
      _
    $region27: #{tpu_custom_call.1} parent=1 // pred_check_branch
      %1193 = sbr.rel (0) target = $region29
    $region28: #{tpu_custom_call.1} parent=1 // pred_region
      %1195 = dma.done [#allocation4], 4096
    $region29: #{tpu_custom_call.1} parent=1 // pred_fallthru
      _
    %1196 = vsyncpa [#allocation4], 1

</llo_original>
